<compile_context>
chip_gen: v5e
topology: v5e:2x2
jax: 0.10.0
libtpu: 0.0.40
codegen_flags: <defaults>
</compile_context>

<pallas_src>
import functools

import jax
import jax.numpy as jnp
from jax.experimental import pallas as pl
from jax.experimental.pallas import tpu as pltpu

_LANES = 128


def _round_up(x: int, m: int) -> int:
    return ((x + m - 1) // m) * m


def _sublane_for_itemsize(itemsize: int) -> int:
    return {4: 8, 2: 16, 1: 32}.get(itemsize, 8)


# ----------------------------------------------------------------------------
# signatory.logsignature_channels(path_dim, depth) re-implemented (Witt formula)
# so the script is self-contained (no signatory dependency).
# ----------------------------------------------------------------------------
def _mobius(n: int) -> int:
    if n == 1:
        return 1
    result = 1
    p = 2
    m = n
    while p * p <= m:
        if m % p == 0:
            m //= p
            if m % p == 0:  # squared prime factor
                return 0
            result = -result
        p += 1
    if m > 1:
        result = -result
    return result


def logsignature_channels(path_dim: int, depth: int) -> int:
    """Number of log-signature channels = dim of free Lie algebra up to `depth`."""
    total = 0
    for k in range(1, depth + 1):
        s = 0
        for d in range(1, k + 1):
            if k % d == 0:
                s += _mobius(d) * path_dim ** (k // d)
        total += s // k
    return total


# ----------------------------------------------------------------------------
# Pallas kernel: streaming sum of squared differences over lane-dense tiles.
# Hot loop: vld / vsub / vmul / vadd into an (8,128) f32 VMEM accumulator.
# Finalize: one cross-lane reduce -> scalar SMEM output (scale applied in XLA).
# ----------------------------------------------------------------------------
def _char_disc_kernel(fake_ref, real_ref, out_ref, acc_ref, *,
                      tile_rows: int, total_rows: int, needs_mask: bool):
    pid = pl.program_id(0)

    @pl.when(pid == 0)
    def _init():
        acc_ref[...] = jnp.zeros_like(acc_ref)

    # Explicit f32 cast keeps the VPU path valid for bf16 inputs (v5e has no
    # bf16 VALU) and gives an f32 accumulator.
    fake = fake_ref[...].astype(jnp.float32)
    real = real_ref[...].astype(jnp.float32)
    diff = fake - real
    sq = diff * diff

    if needs_mask:
        # Last grid step may overrun the array; out-of-bounds block contents
        # are unspecified, so zero rows past `total_rows`.
        row_ids = jax.lax.broadcasted_iota(jnp.int32, (tile_rows, 1), 0)
        valid = row_ids < (total_rows - pid * tile_rows)
        sq = jnp.where(valid, sq, jnp.float32(0.0))

    # Fold sublane groups into the (8,128) accumulator: pure VALU adds, no XLU
    # reduce and no SMEM scalar RMW in the per-step hot path.
    acc_ref[...] += sq.reshape(tile_rows // 8, 8, _LANES).sum(axis=0)

    @pl.when(pid == pl.num_programs(0) - 1)
    def _finalize():
        out_ref[0] = jnp.sum(acc_ref[...])


# ----------------------------------------------------------------------------
# Pure-JAX reference (also the dispatch target for small inputs).
# ----------------------------------------------------------------------------
def _reference(fake, real, t=0.1):
    diff = fake.astype(jnp.float32) - real.astype(jnp.float32)
    return jnp.exp(jnp.float32(-t)) * jnp.mean(diff * diff)


class CharacteristicDiscriminator:
    """JAX/Pallas counterpart of Characteristic_Discriminator."""

    def __init__(self, batch_size: int, path_dim: int, logsig_level: int = 2):
        self.batch_size = batch_size
        self.path_dim = path_dim
        self.logsig_length = logsignature_channels(path_dim, logsig_level)

    def sample_coefficients(self, key):
        # TODO(synk): reference sample_coefficients() is NotImplementedError;
        # deterministic (given key) Gaussian coefficients used here.
        return jax.random.normal(
            key, (self.batch_size, self.logsig_length), dtype=jnp.float32
        )

    def __call__(self, fake_characteristic, real_characteristic, t: float = 0.1,
                 use_pallas=None, tile_rows: int = 2048,
                 pallas_min_bytes: int = 1 << 20):
        assert fake_characteristic.shape == (self.batch_size, self.logsig_length)
        assert real_characteristic.shape == (self.batch_size, self.logsig_length)
        assert fake_characteristic.dtype == real_characteristic.dtype

        n = self.batch_size * self.logsig_length          # valid elements
        itemsize = jnp.dtype(fake_characteristic.dtype).itemsize

        # Auto-dispatch: for small inputs a single fused XLA HLO beats
        # kernel-launch + repack + per-step grid overhead by a wide margin.
        if use_pallas is None:
            use_pallas = n * itemsize >= pallas_min_bytes
        if not use_pallas:
            return _reference(fake_characteristic, real_characteristic, t)

        # --- lane-dense repack --------------------------------------------
        sublane = _sublane_for_itemsize(itemsize)
        rows = pl.cdiv(n, _LANES)
        padded_rows = _round_up(rows, sublane)            # sublane granularity only
        pad_elems = padded_rows * _LANES - n

        fake_flat = fake_characteristic.reshape(-1)
        real_flat = real_characteristic.reshape(-1)
        if pad_elems:
            # <= sublane*128 - 1 extra elements; when n is already aligned the
            # reshape below is a free metadata op (no copy at all).
            fake_flat = jnp.pad(fake_flat, (0, pad_elems))
            real_flat = jnp.pad(real_flat, (0, pad_elems))
        fake2d = fake_flat.reshape(padded_rows, _LANES)
        real2d = real_flat.reshape(padded_rows, _LANES)

        # --- tiling ----------------------------------------------------------
        tb = min(_round_up(tile_rows, sublane), padded_rows)
        grid_steps = pl.cdiv(padded_rows, tb)
        needs_mask = (padded_rows % tb) != 0

        kernel = functools.partial(
            _char_disc_kernel,
            tile_rows=tb, total_rows=padded_rows, needs_mask=needs_mask,
        )

        # Scoped VMEM sized to the actual need (2 inputs x 2 pipeline buffers
        # + accumulator) plus headroom, so XLA keeps room to fuse producers.
        vmem_bytes = 2 * 2 * tb * _LANES * itemsize + (2 << 20)

        cost = pl.CostEstimate(
            flops=3 * n,
            transcendentals=0,
            bytes_accessed=2 * padded_rows * _LANES * itemsize + 4,
        )

        out = pl.pallas_call(
            kernel,
            out_shape=jax.ShapeDtypeStruct((1,), jnp.float32),
            grid_spec=pltpu.PrefetchScalarGridSpec(
                num_scalar_prefetch=0,
                grid=(grid_steps,),
                in_specs=[
                    pl.BlockSpec((tb, _LANES), lambda i: (i, 0)),   # fake tile
                    pl.BlockSpec((tb, _LANES), lambda i: (i, 0)),   # real tile
                ],
                out_specs=pl.BlockSpec(memory_space=pltpu.MemorySpace.SMEM),
                scratch_shapes=[pltpu.VMEM((8, _LANES), jnp.float32)],
            ),
            compiler_params=pltpu.CompilerParams(
                dimension_semantics=("arbitrary",),      # carried reduction
                vmem_limit_bytes=int(vmem_bytes),
            ),
            cost_estimate=cost,
        )(fake2d, real2d)

        # Single fused scalar: exp(-t) / N, applied once on the scalar output.
        scale = jnp.exp(jnp.float32(-t)) / jnp.float32(n)
        return out[0] * scale


if __name__ == "__main__":
    batch_size = 8
    path_dim = 4
    logsig_level = 2

    disc = CharacteristicDiscriminator(batch_size, path_dim, logsig_level)
    # path_dim=4, level=2  ->  logsig_length = 4 + 6 = 10

    key = jax.random.PRNGKey(0)
    k1, k2, k3, k4, k5, k6 = jax.random.split(key, 6)

    # 1) Real-world tiny shape: auto-dispatches to the fused XLA path.
    fake_characteristic = jax.random.normal(
        k1, (batch_size, disc.logsig_length), dtype=jnp.float32
    )
    real_characteristic = jax.random.normal(
        k2, (batch_size, disc.logsig_length), dtype=jnp.float32
    )
    out = jax.block_until_ready(disc(fake_characteristic, real_characteristic, t=0.1))
    ref = _reference(fake_characteristic, real_characteristic, t=0.1)
    assert jnp.allclose(out, ref, rtol=1e-5, atol=1e-6), (out, ref)

    # 2) Forced Pallas path, lane-aligned n (no pad), multi-step grid with a
    #    partial (masked) last block: 512*10 = 5120 elems -> 40 rows, tb=16.
    disc2 = CharacteristicDiscriminator(512, path_dim, logsig_level)
    f2 = jax.random.normal(k3, (512, disc2.logsig_length), dtype=jnp.float32)
    r2 = jax.random.normal(k4, (512, disc2.logsig_length), dtype=jnp.float32)
    out2 = jax.block_until_ready(disc2(f2, r2, t=0.3, use_pallas=True, tile_rows=16))
    ref2 = _reference(f2, r2, t=0.3)
    assert jnp.allclose(out2, ref2, rtol=1e-4, atol=1e-6), (out2, ref2)

    # 3) Forced Pallas path, misaligned n (small sublane pad) + masked tail:
    #    1000*10 = 10000 elems -> 79 rows -> padded 80, tb=24 -> grid=4.
    disc3 = CharacteristicDiscriminator(1000, path_dim, logsig_level)
    f3 = jax.random.normal(k5, (1000, disc3.logsig_length), dtype=jnp.float32)
    r3 = jax.random.normal(k6, (1000, disc3.logsig_length), dtype=jnp.float32)
    out3 = jax.block_until_ready(disc3(f3, r3, t=0.2, use_pallas=True, tile_rows=24))
    ref3 = _reference(f3, r3, t=0.2)
    assert jnp.allclose(out3, ref3, rtol=1e-4, atol=1e-6), (out3, ref3)

    # 4) Forced Pallas path with bf16 inputs (16-sublane packing path).
    f4 = f2.astype(jnp.bfloat16)
    r4 = r2.astype(jnp.bfloat16)
    out4 = jax.block_until_ready(disc2(f4, r4, t=0.1, use_pallas=True, tile_rows=16))
    ref4 = _reference(f4, r4, t=0.1)
    assert jnp.allclose(out4, ref4, rtol=1e-3, atol=1e-5), (out4, ref4)

    print("KERNEL_OK")
</pallas_src>

<mosaic_0001>
module attributes {stable_mosaic.version = 11 : i64} {
  func.func @_char_disc_kernel(%arg0: i32, %arg1: memref<16x128xf32, #tpu.memory_space<vmem>>, %arg2: memref<16x128xf32, #tpu.memory_space<vmem>>, %arg3: memref<1xf32, #tpu.memory_space<smem>>, %arg4: memref<8x128xf32, #tpu.memory_space<vmem>>) attributes {dimension_semantics = [#tpu.dimension_semantics<arbitrary>], iteration_bounds = array<i64: 3>, scalar_prefetch = 0 : i64, scratch_operands = 1 : i64, tpu.core_type = #tpu.core_type<tc>, window_params = [{transform_indices = @transform_0, window_bounds = array<i64: 16, 128>}, {transform_indices = @transform_1, window_bounds = array<i64: 16, 128>}, {transform_indices = @transform_2, window_bounds = array<i64: 1>}]} {
    %c0_i32 = arith.constant 0 : i32
    %0 = arith.cmpi eq, %arg0, %c0_i32 : i32
    %1 = arith.extui %0 : i1 to i32
    %c0_i32_0 = arith.constant 0 : i32
    %2 = arith.cmpi ne, %1, %c0_i32_0 : i32
    scf.if %2 {
      %cst_10 = arith.constant 0.000000e+00 : f32
      %24 = vector.broadcast %cst_10 : f32 to vector<8x128xf32>
      %c0_11 = arith.constant 0 : index
      %c0_12 = arith.constant 0 : index
      %25 = vector.load %arg4[%c0_11, %c0_12] : memref<8x128xf32, #tpu.memory_space<vmem>>, vector<8x128xf32>
      tpu.vector_store %arg4[%c0_11, %c0_12], %24 {strides = array<i32>} : memref<8x128xf32, #tpu.memory_space<vmem>>, vector<8x128xf32>,
    } else {
    }
    %c0 = arith.constant 0 : index
    %c0_1 = arith.constant 0 : index
    %3 = vector.load %arg1[%c0, %c0_1] : memref<16x128xf32, #tpu.memory_space<vmem>>, vector<16x128xf32>
    %c0_2 = arith.constant 0 : index
    %c0_3 = arith.constant 0 : index
    %4 = vector.load %arg2[%c0_2, %c0_3] : memref<16x128xf32, #tpu.memory_space<vmem>>, vector<16x128xf32>
    %5 = arith.subf %3, %4 : vector<16x128xf32>
    %6 = arith.mulf %5, %5 : vector<16x128xf32>
    %7 = tpu.iota {dimensions = array<i32: 0>} : vector<16x1xi32>
    %c16_i32 = arith.constant 16 : i32
    %8 = arith.muli %arg0, %c16_i32 : i32
    %c40_i32 = arith.constant 40 : i32
    %9 = arith.subi %c40_i32, %8 : i32
    %10 = vector.broadcast %9 : i32 to vector<16x1xi32>
    %11 = arith.cmpi slt, %7, %10 : vector<16x1xi32>
    %cst = arith.constant 0.000000e+00 : f32
    %12 = vector.shape_cast %11 : vector<16x1xi1> to vector<16x1xi1>
    %13 = vector.broadcast %12 : vector<16x1xi1> to vector<16x128xi1>
    %14 = vector.broadcast %cst : f32 to vector<16x128xf32>
    %15 = arith.select %13, %6, %14 : vector<16x128xi1>, vector<16x128xf32>
    %c0_4 = arith.constant 0 : index
    %c0_5 = arith.constant 0 : index
    %16 = vector.load %arg4[%c0_4, %c0_5] : memref<8x128xf32, #tpu.memory_space<vmem>>, vector<8x128xf32>
    %17 = vector.shape_cast %15 : vector<16x128xf32> to vector<2x8x128xf32>
    %cst_6 = arith.constant dense<0.000000e+00> : vector<8x128xf32>
    %18 = vector.multi_reduction <add>, %17, %cst_6 [0] : vector<2x8x128xf32> to vector<8x128xf32>
    %19 = arith.addf %16, %18 : vector<8x128xf32>
    %c0_7 = arith.constant 0 : index
    %c0_8 = arith.constant 0 : index
    %20 = vector.load %arg4[%c0_7, %c0_8] : memref<8x128xf32, #tpu.memory_space<vmem>>, vector<8x128xf32>
    tpu.vector_store %arg4[%c0_7, %c0_8], %19 {strides = array<i32>} : memref<8x128xf32, #tpu.memory_space<vmem>>, vector<8x128xf32>,
    %c2_i32 = arith.constant 2 : i32
    %21 = arith.cmpi eq, %arg0, %c2_i32 : i32
    %22 = arith.extui %21 : i1 to i32
    %c0_i32_9 = arith.constant 0 : i32
    %23 = arith.cmpi ne, %22, %c0_i32_9 : i32
    scf.if %23 {
      %c0_10 = arith.constant 0 : index
      %c0_11 = arith.constant 0 : index
      %24 = vector.load %arg4[%c0_10, %c0_11] : memref<8x128xf32, #tpu.memory_space<vmem>>, vector<8x128xf32>
      %25 = vector.shape_cast %24 : vector<8x128xf32> to vector<1x8x128xf32>
      %cst_12 = arith.constant dense<0.000000e+00> : vector<1xf32>
      %26 = vector.multi_reduction <add>, %25, %cst_12 [1, 2] : vector<1x8x128xf32> to vector<1xf32>
      %27 = vector.shape_cast %26 : vector<1xf32> to vector<1x1x1xf32>
      %28 = vector.extract %27[0, 0, 0] : f32 from vector<1x1x1xf32>
      %c0_13 = arith.constant 0 : index
      %29 = memref.load %arg3[%c0_13] : memref<1xf32, #tpu.memory_space<smem>>
      memref.store %28, %arg3[%c0_13] : memref<1xf32, #tpu.memory_space<smem>>
    } else {
    }
    return
  }
  func.func @transform_0(%arg0: i32) -> (i32, i32) {
    %c0_i32 = arith.constant 0 : i32
    %c0_i32_0 = arith.constant 0 : i32
    return %arg0, %c0_i32 : i32, i32
  }
  func.func @transform_1(%arg0: i32) -> (i32, i32) {
    %c0_i32 = arith.constant 0 : i32
    %c0_i32_0 = arith.constant 0 : i32
    return %arg0, %c0_i32 : i32, i32
  }
  func.func @transform_2(%arg0: i32) -> i32 {
    %c0_i32 = arith.constant 0 : i32
    %c0_i32_0 = arith.constant 0 : i32
    return %c0_i32 : i32
  }
}

</mosaic_0001>

<llo_original>
// kernel: tpu_custom_call.1
$region0: #{tpu_custom_call.1}
  #allocation0 [shape = 'u32[]', space=smem, size = 0x4, offset = 0x4, fixed_abs, tag = 'smem constant byte address 0x4 - core index']
  #allocation1 [shape = 'u32[72,128]{1,0:T(1,128)}', space=vmem, size = 0x9000, scoped, tag = 'internal scratch']
  #allocation2 [shape = 'f32[8,128]{1,0:T(8,128)}', space=vmem, size = 0x1000, scoped, tag = 'scratch operand']
  %s0 = inlined_call_operand.hbm [shape: f32[40,128], index: 0, kind: input, shape index: {}]
  %s1 = inlined_call_operand.hbm [shape: f32[40,128], index: 1, kind: input, shape index: {}]
  %s2 = inlined_call_operand.hbm [shape: f32[1], index: 2, kind: output, shape index: {}]
  %s3 = sld [smem:[#allocation0]]
  $region57: #{tpu_custom_call.1} parent=0
    _
  %s5 = ssub.s32 1, %s3
  %s6 = scalar_select 0, %s5, %s3
  $region1: #{tpu_custom_call.1} parent=0
    #allocation3 [shape = 'u8[16384]{0}', space=vmem, size = 0x4000, scoped, tag = 'input window, operand 0']
    #allocation4 [shape = 's32[2]{0}', space=sflag, size = 0x8, scoped, tag = 'scoped memory for tpu_custom_call.1']
    #allocation5 [shape = 's32[2]{0}', space=sflag, size = 0x8, scoped, tag = 'scoped memory for tpu_custom_call.1']
    #allocation6 [shape = 'u8[16384]{0}', space=vmem, size = 0x4000, scoped, tag = 'input window, operand 1']
    #allocation7 [shape = 's32[2]{0}', space=sflag, size = 0x8, scoped, tag = 'scoped memory for tpu_custom_call.1']
    #allocation8 [shape = 'u8[512]{0}', space=smem, size = 0x200, scoped, tag = 'output window, operand 0, single buffered']
    %7 = vsyncpa [#allocation4], 0
    %s8 = scalar_lea.sflag [#allocation4], 1
    %9 = vsyncpa %s8, 0
    %10 = vsyncpa [#allocation7], 0
    %s11 = scalar_lea.sflag [#allocation7], 1
    %12 = vsyncpa %s11, 0
    %13 = vsyncpa [#allocation5], 0
    loop: start=0, step=1, limit=5
    $region2: #{tpu_custom_call.1} parent=1 // loop_pre_header
      _
    $region3: #{tpu_custom_call.1} parent=1 // loop_header
      %s15 = sphi 0, %s19
      %p16 = scmp.ge.s32.totalorder %s15, 5
      %s25 = sphi 0, %s27
      %s28 = sphi 0, %s25
      %s29 = sphi 0, %s28
      %s45 = sphi 0, %s29
      %s51 = sphi 0, %s53
      %s54 = sphi 0, %s51
      %s55 = sphi 0, %s54
      %s71 = sphi 0, %s55
      %s75 = sphi 0, %s75
      %s77 = sphi 0, %s75
      %s78 = sphi 0, %s77
      %s92 = sphi 0, %s78
    $region4: #{tpu_custom_call.1} parent=1 // loop_header_branch
      %18 = sbr.rel (%p16) target = $region8
    $region5: #{tpu_custom_call.1} parent=1 // loop_body
      %s20 = ssub.s32 %s15, 1
      %s21 = ssub.s32 %s15, 2
      %s22 = sadd.s32 %s15, 1
      %s23 = ssub.s32 %s15, %s22
      %p24 = scmp.eq.s32.totalorder %s23, 0
      %s26 = sadd.s32 %s25, 1
      %s27 = scalar_select %p24, %s25, %s26
      %p30 = pneg %p24
      %p31 = scmp.eq.s32.totalorder %s15, 2
      %p32 = por %p30, %p31
      %p33 = scmp.ne.s32.totalorder %s25, %s28
      %p34 = scmp.eq.s32.totalorder %s15, 0
      %p35 = por %p33, %p34
      %p36 = scmp.ne.s32.totalorder %s25, %s28
      %p37 = scmp.eq.s32.totalorder %s20, 2
      %p38 = por %p36, %p37
      %p39 = scmp.ne.s32.totalorder %s28, %s29
      %p40 = scmp.eq.s32.totalorder %s20, 0
      %p41 = por %p39, %p40
      %p42 = scmp.ne.s32.totalorder %s28, %s29
      %p43 = scmp.eq.s32.totalorder %s21, 2
      %p44 = por %p42, %p43
      %p46 = scmp.ne.s32.totalorder %s29, %s45
      %p47 = scmp.eq.s32.totalorder %s21, 0
      %p48 = por %p46, %p47
      %s49 = ssub.s32 %s15, %s22
      %p50 = scmp.eq.s32.totalorder %s49, 0
      %s52 = sadd.s32 %s51, 1
      %s53 = scalar_select %p50, %s51, %s52
      %p56 = pneg %p50
      %p57 = scmp.eq.s32.totalorder %s15, 2
      %p58 = por %p56, %p57
      %p59 = scmp.ne.s32.totalorder %s51, %s54
      %p60 = scmp.eq.s32.totalorder %s15, 0
      %p61 = por %p59, %p60
      %p62 = scmp.ne.s32.totalorder %s51, %s54
      %p63 = scmp.eq.s32.totalorder %s20, 2
      %p64 = por %p62, %p63
      %p65 = scmp.ne.s32.totalorder %s54, %s55
      %p66 = scmp.eq.s32.totalorder %s20, 0
      %p67 = por %p65, %p66
      %p68 = scmp.ne.s32.totalorder %s54, %s55
      %p69 = scmp.eq.s32.totalorder %s21, 2
      %p70 = por %p68, %p69
      %p72 = scmp.ne.s32.totalorder %s55, %s71
      %p73 = scmp.eq.s32.totalorder %s21, 0
      %p74 = por %p72, %p73
      %s76 = sadd.s32 %s75, 1
      %p79 = scmp.eq.s32.totalorder %s15, 2
      %p80 = scmp.ne.s32.totalorder %s75, %s77
      %p81 = scmp.eq.s32.totalorder %s15, 0
      %p82 = por %p80, %p81
      %p83 = scmp.ne.s32.totalorder %s75, %s77
      %p84 = scmp.eq.s32.totalorder %s20, 2
      %p85 = por %p83, %p84
      %p86 = scmp.ne.s32.totalorder %s77, %s78
      %p87 = scmp.eq.s32.totalorder %s20, 0
      %p88 = por %p86, %p87
      %p89 = scmp.ne.s32.totalorder %s77, %s78
      %p90 = scmp.eq.s32.totalorder %s21, 2
      %p91 = por %p89, %p90
      %p93 = scmp.ne.s32.totalorder %s78, %s92
      %p94 = scmp.eq.s32.totalorder %s21, 0
      %p95 = por %p93, %p94
      %p96 = scmp.le.s32.totalorder 1, %s15
      %p97 = scmp.lt.s32.totalorder %s15, 4
      %p98 = pnand %p96, %p97
      %p99 = pneg %p98
      // Predicated region
      $region9: #{tpu_custom_call.1} parent=5 // pred_check
        _
      $region10: #{tpu_custom_call.1} parent=5 // pred_check_branch
        %101 = sbr.rel (%p98) target = $region12
      $region11: #{tpu_custom_call.1} parent=5 // pred_region
        %s102 = ssub.s32 %s15, 1
      $region12: #{tpu_custom_call.1} parent=5 // pred_fallthru
        _
      %p103 = scmp.lt.s32.totalorder %s15, 3
      // Predicated region
      $region13: #{tpu_custom_call.1} parent=5 // pred_check
        %p104 = pneg %p103
      $region14: #{tpu_custom_call.1} parent=5 // pred_check_branch
        %106 = sbr.rel (%p104) target = $region16
      $region15: #{tpu_custom_call.1} parent=5 // pred_region
        // Predicated region
        $region17: #{tpu_custom_call.1} parent=15 // pred_check
          %p107 = pneg %p35
        $region18: #{tpu_custom_call.1} parent=15 // pred_check_branch
          %109 = sbr.rel (%p107) target = $region20
        $region19: #{tpu_custom_call.1} parent=15 // pred_region
          %s110 = sand.u32 %s25, 1
          %s111 = scalar_lea.sflag [#allocation4], %s110
          %s112 = sand.u32 %s25, 1
          %s113 = smul.addr %s112, 16
          %s114 = scalar_lea.vmem [#allocation3], %s113
          %s115 = smul.u32 2, %s15
          %s116 = ssub.s32 5, %s115
          %p117 = scmp.lt.s32.totalorder %s116, 2
          %s118 = scalar_select %p117, %s116, 2
          %s119 = smul.u32 8, %s118
          %s120 = ssub.s32 16, %s119
          %s121 = sshll.u32 %s120, 4
          %122 = vsyncadd %s111, %s121
          %p123 = scmp.ne.s32.totalorder 0, %s119
          %s124 = smul.addr %s115, 8
          %s125 = scalar_lea.hbm %s0, %s124
          %s126 = smul.u32 8, %s118
          %s127 = sshll.u32 %s125, 4
          %s128 = int_to_ptr.hbm [resolvable:$true] %s127
          %s129 = sshll.u32 %s114, 4
          %s130 = int_to_ptr.vmem [resolvable:$true] %s129
          %s131 = sshll.u32 %s126, 4
          %135 = dma.hbm_to_vmem [thread:$0]  (%p123), %s128, %s131, %s130, %s111, 128, 128, 8
        $region20: #{tpu_custom_call.1} parent=15 // pred_fallthru
          _
        // Predicated region
        $region21: #{tpu_custom_call.1} parent=15 // pred_check
          %p136 = pneg %p61
        $region22: #{tpu_custom_call.1} parent=15 // pred_check_branch
          %138 = sbr.rel (%p136) target = $region24
        $region23: #{tpu_custom_call.1} parent=15 // pred_region
          %s139 = sand.u32 %s51, 1
          %s140 = scalar_lea.sflag [#allocation7], %s139
          %s141 = sand.u32 %s51, 1
          %s142 = smul.addr %s141, 16
          %s143 = scalar_lea.vmem [#allocation6], %s142
          %s144 = smul.u32 2, %s15
          %s145 = ssub.s32 5, %s144
          %p146 = scmp.lt.s32.totalorder %s145, 2
          %s147 = scalar_select %p146, %s145, 2
          %s148 = smul.u32 8, %s147
          %s149 = ssub.s32 16, %s148
          %s150 = sshll.u32 %s149, 4
          %151 = vsyncadd %s140, %s150
          %p152 = scmp.ne.s32.totalorder 0, %s148
          %s153 = smul.addr %s144, 8
          %s154 = scalar_lea.hbm %s1, %s153
          %s155 = smul.u32 8, %s147
          %s156 = sshll.u32 %s154, 4
          %s157 = int_to_ptr.hbm [resolvable:$true] %s156
          %s158 = sshll.u32 %s143, 4
          %s159 = int_to_ptr.vmem [resolvable:$true] %s158
          %s160 = sshll.u32 %s155, 4
          %164 = dma.hbm_to_vmem [thread:$0]  (%p152), %s157, %s160, %s159, %s140, 128, 128, 8
        $region24: #{tpu_custom_call.1} parent=15 // pred_fallthru
          _
      $region16: #{tpu_custom_call.1} parent=5 // pred_fallthru
        _
      %p165 = scmp.le.s32.totalorder 1, %s15
      %p166 = scmp.lt.s32.totalorder %s15, 4
      %p167 = pnand %p165, %p166
      %p168 = pneg %p167
      // Predicated region
      $region25: #{tpu_custom_call.1} parent=5 // pred_check
        _
      $region26: #{tpu_custom_call.1} parent=5 // pred_check_branch
        %170 = sbr.rel (%p167) target = $region28
      $region27: #{tpu_custom_call.1} parent=5 // pred_region
        %s171 = ssub.s32 %s15, 1
        %s172 = sand.u32 %s28, 1
        %s173 = scalar_lea.sflag [#allocation4], %s172
        %s174 = sand.u32 %s28, 1
        %s175 = smul.addr %s174, 16
        %s176 = scalar_lea.vmem [#allocation3], %s175
        // Predicated region
        $region29: #{tpu_custom_call.1} parent=27 // pred_check
          %p177 = pneg %p41
        $region30: #{tpu_custom_call.1} parent=27 // pred_check_branch
          %179 = sbr.rel (%p177) target = $region32
        $region31: #{tpu_custom_call.1} parent=27 // pred_region
          %181 = dma.done %s173, 256
        $region32: #{tpu_custom_call.1} parent=27 // pred_fallthru
          _
        %s182 = sand.u32 %s54, 1
        %s183 = scalar_lea.sflag [#allocation7], %s182
        %s184 = sand.u32 %s54, 1
        %s185 = smul.addr %s184, 16
        %s186 = scalar_lea.vmem [#allocation6], %s185
        // Predicated region
        $region33: #{tpu_custom_call.1} parent=27 // pred_check
          %p187 = pneg %p67
        $region34: #{tpu_custom_call.1} parent=27 // pred_check_branch
          %189 = sbr.rel (%p187) target = $region36
        $region35: #{tpu_custom_call.1} parent=27 // pred_region
          %191 = dma.done %s183, 256
        $region36: #{tpu_custom_call.1} parent=27 // pred_fallthru
          _
        %s192 = sand.u32 %s28, 1
        %s193 = scalar_lea.sflag [#allocation4], %s192
        %s194 = sand.u32 %s28, 1
        %s195 = smul.addr %s194, 16
        %s196 = scalar_lea.vmem [#allocation3], %s195
        %p197 = pneg %p41
        %p198 = pneg %p38
        %s199 = sand.u32 %s54, 1
        %s200 = scalar_lea.sflag [#allocation7], %s199
        %s201 = sand.u32 %s54, 1
        %s202 = smul.addr %s201, 16
        %s203 = scalar_lea.vmem [#allocation6], %s202
        %p204 = pneg %p67
        %p205 = pneg %p64
        %p206 = pneg %p88
        %p207 = pneg %p85
        %s208 = smul.u32 2, %s20
        %s209 = ssub.s32 5, %s208
        %p210 = scmp.lt.s32.totalorder %s209, 2
        %s211 = scalar_select %p210, %s209, 2
        %s212 = smul.u32 8, %s211
        %s213 = smul.u32 2, %s20
        %s214 = ssub.s32 5, %s213
        %p215 = scmp.lt.s32.totalorder %s214, 2
        %s216 = scalar_select %p215, %s214, 2
        %s217 = smul.u32 8, %s216
        %p218 = scmp.eq.s32.totalorder %s20, 0
        // Predicated region
        $region37: #{tpu_custom_call.1} parent=27 // pred_check
          %p219 = pneg %p218
        $region38: #{tpu_custom_call.1} parent=27 // pred_check_branch
          %221 = sbr.rel (%p219) target = $region40
        $region39: #{tpu_custom_call.1} parent=27 // pred_region
          %222 = vst [vmem:[#allocation2] sm:$0xff] 0.0
        $region40: #{tpu_custom_call.1} parent=27 // pred_fallthru
          _
        %v223 = vld [vmem:[%s176] sm:$0xff]
        %v224 = vld [vmem:[%s176 + $0x8] sm:$0xff]
        %v225 = vld [vmem:[%s186] sm:$0xff]
        %v226 = vld [vmem:[%s186 + $0x8] sm:$0xff]
        %v227 = vsub.f32 %v223, %v225
        %v228 = vsub.f32 %v224, %v226
        %v229 = vmul.f32 %v227, %v227
        %v230 = vmul.f32 %v228, %v228
        %v231 = vlaneseq
        %v232 = vshrl.u32 %v231, 7
        %v233 = vadd.s32 %v232, 8
        %s234 = smul.u32 %s20, 16
        %s235 = ssub.s32 40, %s234
        %v236 = vstv %s235
        %vm237 = vcmp.lt.s32.totalorder %v232, %v236
        %vm238 = vcmp.lt.s32.totalorder %v233, %v236
        %v239 = vsel %vm237, 1, 0
        %v240 = vsel %vm238, 1, 0
        %vm241 = vcmp.eq.s32.totalorder %v239, 1
        %vm242 = vcmp.eq.s32.totalorder %v240, 1
        %v243 = vsel %vm241, %v229, 0.0
        %v244 = vsel %vm242, %v230, 0.0
        %v245 = vld [vmem:[#allocation2] sm:$0xff]
        %v246 = vadd.f32 %v243, %v244
        %v247 = vadd.f32 %v245, %v246
        %248 = vst [vmem:[#allocation2] sm:$0xff] %v247
        %p249 = scmp.eq.s32.totalorder %s20, 2
        // Predicated region
        $region41: #{tpu_custom_call.1} parent=27 // pred_check
          %p250 = pneg %p249
        $region42: #{tpu_custom_call.1} parent=27 // pred_check_branch
          %252 = sbr.rel (%p250) target = $region44
        $region43: #{tpu_custom_call.1} parent=27 // pred_region
          %v253 = vld [vmem:[#allocation2] sm:$0xff]
          %254 = vadd.xlane.f32.xlu0 %v253
          %v255 = vpop.xlane.xlu0 %254
          %v256 = vrot.slane %v255, 4
          %v257 = vadd.f32 %v255, %v256
          %v258 = vrot.slane %v257, 2
          %v259 = vadd.f32 %v257, %v258
          %v260 = vrot.slane %v259, 1
          %v261 = vadd.f32 %v259, %v260
          %s262 = vtos %v261
          %s263 = scalar_lea.smem [#allocation8], 0
          %264 = sst [smem:[%s263]] %s262
        $region44: #{tpu_custom_call.1} parent=27 // pred_fallthru
          _
        // Predicated region
        $region45: #{tpu_custom_call.1} parent=27 // pred_check
          %p265 = pneg %p85
        $region46: #{tpu_custom_call.1} parent=27 // pred_check_branch
          %267 = sbr.rel (%p265) target = $region48
        $region47: #{tpu_custom_call.1} parent=27 // pred_region
          %269 = vsyncadd [#allocation5], 0
          %s271 = sshll.u32 %s2, 4
          %s272 = int_to_ptr.hbm [resolvable:$true] %s271
          %274 = dma.smem_to_hbm [#allocation8], 16, %s272, [#allocation5]
        $region48: #{tpu_custom_call.1} parent=27 // pred_fallthru
          _
        // Predicated region
        $region49: #{tpu_custom_call.1} parent=27 // pred_check
          %p275 = pneg %p85
        $region50: #{tpu_custom_call.1} parent=27 // pred_check_branch
          %277 = sbr.rel (%p275) target = $region52
        $region51: #{tpu_custom_call.1} parent=27 // pred_region
          %279 = dma.done [#allocation5], 16
        $region52: #{tpu_custom_call.1} parent=27 // pred_fallthru
          _
        %280 = sfence
      $region28: #{tpu_custom_call.1} parent=5 // pred_fallthru
        _
      %p281 = scmp.le.s32.totalorder 2, %s15
      // Predicated region
      $region53: #{tpu_custom_call.1} parent=5 // pred_check
        %p282 = pneg %p281
      $region54: #{tpu_custom_call.1} parent=5 // pred_check_branch
        %284 = sbr.rel (%p282) target = $region56
      $region55: #{tpu_custom_call.1} parent=5 // pred_region
        %s285 = ssub.s32 %s15, 2
      $region56: #{tpu_custom_call.1} parent=5 // pred_fallthru
        _
    $region6: #{tpu_custom_call.1} parent=1 // loop_footer
      %s19 = sadd.s32 1, %s15
    $region7: #{tpu_custom_call.1} parent=1 // loop_footer_branch
      %14 = sbr.rel target = $region3
    $region8: #{tpu_custom_call.1} parent=1 // loop_exit
      _
    %286 = vsyncpa [#allocation4], 1
    %s287 = scalar_lea.sflag [#allocation4], 1
    %288 = vsyncpa %s287, 1
    %289 = vsyncpa [#allocation7], 1
    %s290 = scalar_lea.sflag [#allocation7], 1
    %291 = vsyncpa %s290, 1
    %292 = vsyncpa [#allocation5], 1
    %s293 = scalar_lea.sflag [#allocation5], 1
    %294 = vsyncpa %s293, 1

</llo_original>
